<compile_context>
chip_gen: v7x
topology: tpu7x:2x2x1
jax: 0.10.0
libtpu: 0.0.40
codegen_flags: <defaults>
</compile_context>

<pallas_src>
import functools
import math

import jax
import jax.numpy as jnp
from jax import lax
from jax.experimental import pallas as pl
from jax.experimental.pallas import tpu as pltpu


def _round_up(x, n):
    return ((x + n - 1) // n) * n


# -------------------------------------------------------------- main kernel --
def _arcloss_kernel(feat_ref, w_ref, out_ref, fbuf_ref, ssum_ref,
                    *, s, cos_m, sin_m, pad_bias):
    p = pl.program_id(1)          # 0: accumulate row-sum of exp, 1: finalize
    c = pl.program_id(2)          # class-tile index

    # Normalize feature rows once per batch tile; keep a bf16 copy in VMEM
    # scratch so the MXU operand is not recomputed for every class tile.
    # ssum starts at (C - c_pad): every zero-padded W column adds exp(0) = 1
    # to the row-sum, and this constant bias cancels that exactly.
    @pl.when((p == 0) & (c == 0))
    def _init():
        f = feat_ref[...].astype(jnp.float32)
        inv = lax.rsqrt(jnp.maximum(jnp.sum(f * f, axis=1, keepdims=True),
                                    1e-24))
        fbuf_ref[...] = (f * inv).astype(fbuf_ref.dtype)
        ssum_ref[...] = jnp.full_like(ssum_ref, pad_bias)

    # cos(theta)*s directly: W columns are pre-normalized in the wrapper, so
    # the matmul output already equals cos_theta * s in torch terms (the /s
    # then *s round trip is algebraically removed).
    cos_s = jnp.dot(fbuf_ref[...], w_ref[...],
                    preferred_element_type=jnp.float32)        # MXU, bf16 in

    @pl.when(p == 0)
    def _accumulate():
        ssum_ref[...] += jnp.sum(jnp.exp(cos_s), axis=1, keepdims=True)

    @pl.when(p == 1)
    def _finalize():
        ct = cos_s * (1.0 / s)                                 # torch cos_theat
        sin_t = jnp.sqrt(jnp.maximum(1.0 - ct * ct, 0.0))
        # cos(acos(ct) + m) * s == cos_s*cos(m) - sqrt(1-ct^2)*sin(m)*s
        ctm_s = cos_s * cos_m - sin_t * (sin_m * s)
        e = jnp.exp(cos_s)                                     # exp(ct * s)
        top = jnp.exp(ctm_s)
        denom = top + (ssum_ref[...] - e)
        out_ref[...] = top * pl.reciprocal(denom, approx=True)


# ----------------------------------------------------------------- wrapper ---
def arcloss_forward(feature, w, s=30.0, m=0.5, *, tm_max=512, tn_max=512):
    """ArcLoss forward. feature: (B, F), w: (F, C) -> (B, C) float32."""
    B, F = feature.shape
    Fw, C = w.shape
    assert Fw == F

    # Lane-dense / MXU-friendly padded problem and tile sizes.
    f_pad = _round_up(F, 128)
    b8 = _round_up(B, 8)
    tm = min(_round_up(tm_max, 8), b8)
    # Keep nb >= 2 when the batch is big enough so the "parallel" batch axis
    # spans both v7x TensorCores (no-op on single-TC v5e/v6e).
    if tm == b8 and b8 >= 16:
        tm = _round_up(b8 // 2, 8)
    b_pad = _round_up(B, tm)
    tn = min(_round_up(tn_max, 128), _round_up(C, 128))
    c_pad = _round_up(C, tn)
    nb, nc = b_pad // tm, c_pad // tn

    # Feature: small vs W; pad in f32 (the kernel normalizes rows in f32).
    feat_p = jnp.zeros((b_pad, f_pad), jnp.float32).at[:B, :F].set(
        feature.astype(jnp.float32))

    # W: fold the per-column inverse L2 norm into the bf16 cast (one XLA
    # reduction + scale + cast over the original array), then zero-pad the
    # bf16 result only.  No padded f32 copy of W is ever materialized and the
    # kernel needs no post-matmul column scale.
    w_f32 = w.astype(jnp.float32)
    inv_wnorm = lax.rsqrt(jnp.maximum(
        jnp.sum(w_f32 * w_f32, axis=0, keepdims=True), 1e-24))
    w_bf16 = (w_f32 * inv_wnorm).astype(jnp.bfloat16)
    w_p = jnp.zeros((f_pad, c_pad), jnp.bfloat16).at[:F, :C].set(w_bf16)

    kernel = functools.partial(
        _arcloss_kernel, s=float(s), cos_m=math.cos(m), sin_m=math.sin(m),
        pad_bias=float(C - c_pad))

    # Derive the VMEM limit from the real footprint (inputs/outputs are
    # double-buffered) with headroom, capped at 48 MiB (safe on v7x's 64 MiB).
    vmem_bytes = (2 * (tm * f_pad * 4 + f_pad * tn * 2 + tm * tn * 4)
                  + tm * f_pad * 2 + tm * 4)
    vmem_limit = min(max(2 * vmem_bytes, 32 * 1024 * 1024), 48 * 1024 * 1024)

    # Output index map: during pass 0 every step points at block (i, 0) so no
    # partially-written block is ever flushed; pass 1 walks (i, c) and writes
    # each output block exactly once.
    out_p = pl.pallas_call(
        kernel,
        out_shape=jax.ShapeDtypeStruct((b_pad, c_pad), jnp.float32),
        grid_spec=pltpu.PrefetchScalarGridSpec(
            num_scalar_prefetch=0,
            grid=(nb, 2, nc),
            in_specs=[
                pl.BlockSpec((tm, f_pad), lambda i, p, c: (i, 0)),   # feature
                pl.BlockSpec((f_pad, tn), lambda i, p, c: (0, c)),   # W (bf16)
            ],
            out_specs=pl.BlockSpec((tm, tn), lambda i, p, c: (i, c * p)),
            scratch_shapes=[
                pltpu.VMEM((tm, f_pad), jnp.bfloat16),   # normalized features
                pltpu.VMEM((tm, 1), jnp.float32),        # row-sum of exp
            ],
        ),
        compiler_params=pltpu.CompilerParams(
            dimension_semantics=("parallel", "arbitrary", "arbitrary"),
            vmem_limit_bytes=vmem_limit,
        ),
    )(feat_p, w_p)

    return out_p[:B, :C]


# -------------------------------------------------------------- references ---
def arcloss_reference_f32(feature, w, s=30.0, m=0.5):
    # Exact torch semantics, full f32.
    f = feature / jnp.maximum(
        jnp.linalg.norm(feature, axis=1, keepdims=True), 1e-12)
    wn = w / jnp.maximum(jnp.linalg.norm(w, axis=0, keepdims=True), 1e-12)
    ct = jnp.matmul(f, wn) / s
    ctm = jnp.cos(jnp.arccos(ct) + m)
    e = jnp.exp(ct * s)
    sum_e = jnp.sum(e, axis=1, keepdims=True) - e
    top = jnp.exp(ctm * s)
    return top / (top + sum_e)


def arcloss_reference_matched(feature, w, s=30.0, m=0.5):
    # Mirrors the kernel's numerics (f32 row norms, W column-normalized in f32
    # then cast to bf16, bf16 MXU operands) so it compares at tight tolerance.
    f = feature.astype(jnp.float32)
    f = f * lax.rsqrt(jnp.maximum(jnp.sum(f * f, axis=1, keepdims=True), 1e-24))
    wf = w.astype(jnp.float32)
    inv_wn = lax.rsqrt(jnp.maximum(jnp.sum(wf * wf, axis=0, keepdims=True),
                                   1e-24))
    w_bf16 = (wf * inv_wn).astype(jnp.bfloat16)
    cos_s = jnp.dot(f.astype(jnp.bfloat16), w_bf16,
                    preferred_element_type=jnp.float32)
    ct = cos_s / s
    sin_t = jnp.sqrt(jnp.maximum(1.0 - ct * ct, 0.0))
    ctm_s = cos_s * math.cos(m) - sin_t * (math.sin(m) * s)
    e = jnp.exp(cos_s)
    top = jnp.exp(ctm_s)
    return top / (top + jnp.sum(e, axis=1, keepdims=True) - e)


if __name__ == "__main__":
    s, m = 30.0, 0.5
    key = jax.random.PRNGKey(0)
    k1, k2, k3, k4 = jax.random.split(key, 4)

    # Case 1: shapes matching the toy module (batch=8, feature_num=32, class_num=16).
    feat1 = jax.random.normal(k1, (8, 32), dtype=jnp.float32)
    w1 = jax.random.uniform(k2, (32, 16), dtype=jnp.float32)   # torch.rand init
    out1 = jax.block_until_ready(arcloss_forward(feat1, w1, s=s, m=m))
    assert out1.shape == (8, 16)

    ref1m = arcloss_reference_matched(feat1, w1, s=s, m=m)
    ref1f = arcloss_reference_f32(feat1, w1, s=s, m=m)
    err1m = float(jnp.max(jnp.abs(out1 - ref1m)))
    err1f = float(jnp.max(jnp.abs(out1 - ref1f)))
    assert jnp.allclose(out1, ref1m, atol=5e-3, rtol=5e-3), f"case1 matched err {err1m}"
    assert jnp.allclose(out1, ref1f, atol=3e-2, rtol=3e-2), f"case1 f32 err {err1f}"

    # Case 2: still small, but forces a multi-tile grid (nb=2, nc=2) with a
    # ragged last class tile to exercise padding + ssum bias + accumulation.
    feat2 = jax.random.normal(k3, (16, 48), dtype=jnp.float32)
    w2 = jax.random.uniform(k4, (48, 200), dtype=jnp.float32)
    out2 = jax.block_until_ready(
        arcloss_forward(feat2, w2, s=s, m=m, tm_max=8, tn_max=128))
    assert out2.shape == (16, 200)

    ref2m = arcloss_reference_matched(feat2, w2, s=s, m=m)
    ref2f = arcloss_reference_f32(feat2, w2, s=s, m=m)
    err2m = float(jnp.max(jnp.abs(out2 - ref2m)))
    err2f = float(jnp.max(jnp.abs(out2 - ref2f)))
    assert jnp.allclose(out2, ref2m, atol=5e-3, rtol=5e-3), f"case2 matched err {err2m}"
    assert jnp.allclose(out2, ref2f, atol=3e-2, rtol=3e-2), f"case2 f32 err {err2f}"

    print("KERNEL_OK")
</pallas_src>

<mosaic_0001>
module attributes {stable_mosaic.version = 11 : i64} {
  func.func @_arcloss_kernel(%arg0: i32, %arg1: i32, %arg2: i32, %arg3: memref<8x128xf32, #tpu.memory_space<vmem>>, %arg4: memref<128x128xbf16, #tpu.memory_space<vmem>>, %arg5: memref<8x128xf32, #tpu.memory_space<vmem>>, %arg6: memref<8x128xbf16, #tpu.memory_space<vmem>>, %arg7: memref<8x1xf32, #tpu.memory_space<vmem>>) attributes {dimension_semantics = [#tpu.dimension_semantics<parallel>, #tpu.dimension_semantics<arbitrary>, #tpu.dimension_semantics<arbitrary>], iteration_bounds = array<i64: 1, 2, 1>, scalar_prefetch = 0 : i64, scratch_operands = 2 : i64, tpu.core_type = #tpu.core_type<tc>, window_params = [{transform_indices = @transform_0, window_bounds = array<i64: 8, 128>}, {transform_indices = @transform_1, window_bounds = array<i64: 128, 128>}, {transform_indices = @transform_2, window_bounds = array<i64: 8, 128>}]} {
    %c0_i32 = arith.constant 0 : i32
    %0 = arith.cmpi eq, %arg1, %c0_i32 : i32
    %c0_i32_0 = arith.constant 0 : i32
    %1 = arith.cmpi eq, %arg2, %c0_i32_0 : i32
    %2 = arith.andi %0, %1 : i1
    %3 = arith.extui %2 : i1 to i32
    %c0_i32_1 = arith.constant 0 : i32
    %4 = arith.cmpi ne, %3, %c0_i32_1 : i32
    scf.if %4 {
      %c0_8 = arith.constant 0 : index
      %c0_9 = arith.constant 0 : index
      %14 = vector.load %arg3[%c0_8, %c0_9] : memref<8x128xf32, #tpu.memory_space<vmem>>, vector<8x128xf32>
      %15 = arith.mulf %14, %14 : vector<8x128xf32>
      %cst_10 = arith.constant dense<0.000000e+00> : vector<8xf32>
      %16 = vector.multi_reduction <add>, %15, %cst_10 [1] : vector<8x128xf32> to vector<8xf32>
      %17 = vector.shape_cast %16 : vector<8xf32> to vector<8x1xf32>
      %cst_11 = arith.constant 1.000000e-24 : f32
      %18 = vector.broadcast %cst_11 : f32 to vector<8x1xf32>
      %19 = arith.maximumf %17, %18 : vector<8x1xf32>
      %20 = math.rsqrt %19 : vector<8x1xf32>
      %21 = vector.broadcast %20 : vector<8x1xf32> to vector<8x128xf32>
      %22 = arith.mulf %14, %21 : vector<8x128xf32>
      %23 = arith.truncf %22 : vector<8x128xf32> to vector<8x128xbf16>
      %c0_12 = arith.constant 0 : index
      %c0_13 = arith.constant 0 : index
      %24 = vector.load %arg6[%c0_12, %c0_13] : memref<8x128xbf16, #tpu.memory_space<vmem>>, vector<8x128xbf16>
      tpu.vector_store %arg6[%c0_12, %c0_13], %23 {strides = array<i32>} : memref<8x128xbf16, #tpu.memory_space<vmem>>, vector<8x128xbf16>,
      %cst_14 = arith.constant -1.120000e+02 : f32
      %25 = vector.broadcast %cst_14 : f32 to vector<8x1xf32>
      %c0_15 = arith.constant 0 : index
      %c0_16 = arith.constant 0 : index
      %26 = vector.load %arg7[%c0_15, %c0_16] : memref<8x1xf32, #tpu.memory_space<vmem>>, vector<8x1xf32>
      tpu.vector_store %arg7[%c0_15, %c0_16], %25 {strides = array<i32>} : memref<8x1xf32, #tpu.memory_space<vmem>>, vector<8x1xf32>,
    } else {
    }
    %c0 = arith.constant 0 : index
    %c0_2 = arith.constant 0 : index
    %5 = vector.load %arg6[%c0, %c0_2] : memref<8x128xbf16, #tpu.memory_space<vmem>>, vector<8x128xbf16>
    %c0_3 = arith.constant 0 : index
    %c0_4 = arith.constant 0 : index
    %6 = vector.load %arg4[%c0_3, %c0_4] : memref<128x128xbf16, #tpu.memory_space<vmem>>, vector<128x128xbf16>
    %cst = arith.constant dense<0.000000e+00> : vector<8x128xf32>
    %7 = tpu.matmul %5, %6, %cst {dimension_numbers = #tpu.dot_dimension_numbers<[1], [0], [0], [1], [0, 0, 1, 1], [], []>} : vector<8x128xbf16>, vector<128x128xbf16>, vector<8x128xf32> -> vector<8x128xf32>
    %c0_i32_5 = arith.constant 0 : i32
    %8 = arith.cmpi eq, %arg1, %c0_i32_5 : i32
    %9 = arith.extui %8 : i1 to i32
    %c0_i32_6 = arith.constant 0 : i32
    %10 = arith.cmpi ne, %9, %c0_i32_6 : i32
    scf.if %10 {
      %c0_8 = arith.constant 0 : index
      %c0_9 = arith.constant 0 : index
      %14 = vector.load %arg7[%c0_8, %c0_9] : memref<8x1xf32, #tpu.memory_space<vmem>>, vector<8x1xf32>
      %15 = math.exp %7 : vector<8x128xf32>
      %cst_10 = arith.constant dense<0.000000e+00> : vector<8xf32>
      %16 = vector.multi_reduction <add>, %15, %cst_10 [1] : vector<8x128xf32> to vector<8xf32>
      %17 = vector.shape_cast %16 : vector<8xf32> to vector<8x1xf32>
      %18 = arith.addf %14, %17 : vector<8x1xf32>
      %c0_11 = arith.constant 0 : index
      %c0_12 = arith.constant 0 : index
      %19 = vector.load %arg7[%c0_11, %c0_12] : memref<8x1xf32, #tpu.memory_space<vmem>>, vector<8x1xf32>
      tpu.vector_store %arg7[%c0_11, %c0_12], %18 {strides = array<i32>} : memref<8x1xf32, #tpu.memory_space<vmem>>, vector<8x1xf32>,
    } else {
    }
    %c1_i32 = arith.constant 1 : i32
    %11 = arith.cmpi eq, %arg1, %c1_i32 : i32
    %12 = arith.extui %11 : i1 to i32
    %c0_i32_7 = arith.constant 0 : i32
    %13 = arith.cmpi ne, %12, %c0_i32_7 : i32
    scf.if %13 {
      %cst_8 = arith.constant 0.0333333351 : f32
      %14 = vector.broadcast %cst_8 : f32 to vector<8x128xf32>
      %15 = arith.mulf %7, %14 : vector<8x128xf32>
      %16 = arith.mulf %15, %15 : vector<8x128xf32>
      %cst_9 = arith.constant 1.000000e+00 : f32
      %17 = vector.broadcast %cst_9 : f32 to vector<8x128xf32>
      %18 = arith.subf %17, %16 : vector<8x128xf32>
      %cst_10 = arith.constant 0.000000e+00 : f32
      %19 = vector.broadcast %cst_10 : f32 to vector<8x128xf32>
      %20 = arith.maximumf %18, %19 : vector<8x128xf32>
      %21 = math.sqrt %20 : vector<8x128xf32>
      %cst_11 = arith.constant 0.87758255 : f32
      %22 = vector.broadcast %cst_11 : f32 to vector<8x128xf32>
      %23 = arith.mulf %7, %22 : vector<8x128xf32>
      %cst_12 = arith.constant 14.3827658 : f32
      %24 = vector.broadcast %cst_12 : f32 to vector<8x128xf32>
      %25 = arith.mulf %21, %24 : vector<8x128xf32>
      %26 = arith.subf %23, %25 : vector<8x128xf32>
      %27 = math.exp %7 : vector<8x128xf32>
      %28 = math.exp %26 : vector<8x128xf32>
      %c0_13 = arith.constant 0 : index
      %c0_14 = arith.constant 0 : index
      %29 = vector.load %arg7[%c0_13, %c0_14] : memref<8x1xf32, #tpu.memory_space<vmem>>, vector<8x1xf32>
      %30 = vector.broadcast %29 : vector<8x1xf32> to vector<8x128xf32>
      %31 = arith.subf %30, %27 : vector<8x128xf32>
      %32 = arith.addf %28, %31 : vector<8x128xf32>
      %33 = tpu.reciprocal %32 {approx = true} : vector<8x128xf32> -> vector<8x128xf32>
      %34 = arith.mulf %28, %33 : vector<8x128xf32>
      %c0_15 = arith.constant 0 : index
      %c0_16 = arith.constant 0 : index
      %35 = vector.load %arg5[%c0_15, %c0_16] : memref<8x128xf32, #tpu.memory_space<vmem>>, vector<8x128xf32>
      tpu.vector_store %arg5[%c0_15, %c0_16], %34 {strides = array<i32>} : memref<8x128xf32, #tpu.memory_space<vmem>>, vector<8x128xf32>,
    } else {
    }
    return
  }
  func.func @transform_0(%arg0: i32, %arg1: i32, %arg2: i32) -> (i32, i32) {
    %c0_i32 = arith.constant 0 : i32
    %c0_i32_0 = arith.constant 0 : i32
    return %arg0, %c0_i32 : i32, i32
  }
  func.func @transform_1(%arg0: i32, %arg1: i32, %arg2: i32) -> (i32, i32) {
    %c0_i32 = arith.constant 0 : i32
    %c0_i32_0 = arith.constant 0 : i32
    return %c0_i32, %arg2 : i32, i32
  }
  func.func @transform_2(%arg0: i32, %arg1: i32, %arg2: i32) -> (i32, i32) {
    %0 = arith.muli %arg2, %arg1 : i32
    %c0_i32 = arith.constant 0 : i32
    return %arg0, %0 : i32, i32
  }
}

</mosaic_0001>

<llo_original>
// kernel: tpu_custom_call.1
$region0: #{tpu_custom_call.1}
  #allocation0 [shape = 'u32[]', space=smem, size = 0x4, offset = 0x4, fixed_abs, tag = 'smem constant byte address 0x4 - core index']
  #allocation1 [shape = 'u32[144,128]{1,0:T(1,128)}', space=vmem, size = 0x12000, scoped, tag = 'internal scratch']
  #allocation2 [shape = 'bf16[8,128]{1,0:T(8,128)(2,1)}', space=vmem, size = 0x800, scoped, tag = 'scratch operand']
  #allocation3 [shape = 'f32[8,1]{1,0:T(8,128)}', space=vmem, size = 0x1000, scoped, tag = 'scratch operand']
  %s0 = inlined_call_operand.hbm [shape: f32[8,128], index: 0, kind: input, shape index: {}]
  %s1 = inlined_call_operand.hbm [shape: bf16[128,128], index: 1, kind: input, shape index: {}]
  %s2 = inlined_call_operand.hbm [shape: f32[8,128], index: 2, kind: output, shape index: {}]
  %s3 = sld [smem:[#allocation0]]
  $region61: #{tpu_custom_call.1} parent=0
    _
  %s5 = ssub.s32 1, %s3
  %s6 = scalar_select 0, %s5, %s3
  $region1: #{tpu_custom_call.1} parent=0
    #allocation4 [shape = 'u8[4096]{0}', space=vmem, size = 0x1000, scoped, tag = 'input window, operand 0, single buffered']
    #allocation5 [shape = 's32[2]{0}', space=sflag, size = 0x8, scoped, tag = 'scoped memory for tpu_custom_call.1']
    #allocation6 [shape = 's32[2]{0}', space=sflag, size = 0x8, scoped, tag = 'scoped memory for tpu_custom_call.1']
    #allocation7 [shape = 'u8[32768]{0}', space=vmem, size = 0x8000, scoped, tag = 'input window, operand 1, single buffered']
    #allocation8 [shape = 's32[1]{0}', space=sflag, size = 0x4, scoped, tag = 'scoped memory for tpu_custom_call.1']
    #allocation9 [shape = 'u8[8192]{0}', space=vmem, size = 0x2000, scoped, tag = 'output window, operand 0']
    %7 = vsyncpa [#allocation5], 0
    %8 = vsyncpa [#allocation8], 0
    %9 = vsyncpa [#allocation6], 0
    %s10 = scalar_lea.sflag [#allocation6], 1
    %11 = vsyncpa %s10, 0
    loop: start=0, step=1, limit=4
    $region2: #{tpu_custom_call.1} parent=1 // loop_pre_header
      _
    $region3: #{tpu_custom_call.1} parent=1 // loop_header
      %s13 = sphi 0, %s17
      %p14 = scmp.ge.s32.totalorder %s13, 4
      %s20 = sphi 0, %s39
      %s21 = sphi 0, %s35
      %s22 = sphi 0, %s31
      %s23 = sphi 0, %s20
      %s24 = sphi 0, %s21
      %s25 = sphi 0, %s22
      %s26 = sphi 0, %s23
      %s27 = sphi 0, %s24
      %s28 = sphi 0, %s25
      %s42 = sphi 0, %s44
      %s45 = sphi 0, %s42
      %s46 = sphi 0, %s45
      %s62 = sphi 0, %s46
      %s68 = sphi 0, %s70
      %s71 = sphi 0, %s68
      %s72 = sphi 0, %s71
      %s88 = sphi 0, %s72
      %s98 = sphi 0, %s100
      %s101 = sphi 0, %s98
      %s102 = sphi 0, %s101
      %s118 = sphi 0, %s102
    $region4: #{tpu_custom_call.1} parent=1 // loop_header_branch
      %16 = sbr.rel (%p14) target = $region8
    $region5: #{tpu_custom_call.1} parent=1 // loop_body
      %s18 = ssub.s32 %s13, 1
      %s19 = ssub.s32 %s13, 2
      %s29 = sadd.s32 1, %s22
      %p30 = scmp.ge.s32.totalorder %s29, 1
      %s31 = scalar_select %p30, 0, %s29
      %s32 = sadd.s32 1, %s21
      %s33 = scalar_select %p30, %s32, %s21
      %p34 = scmp.ge.s32.totalorder %s33, 2
      %s35 = scalar_select %p34, 0, %s33
      %s36 = sadd.s32 1, %s20
      %s37 = scalar_select %p34, %s36, %s20
      %p38 = scmp.ge.s32.totalorder %s37, 1
      %s39 = scalar_select %p38, 0, %s37
      %s40 = ssub.s32 %s20, %s39
      %p41 = scmp.eq.s32.totalorder %s40, 0
      %s43 = sadd.s32 %s42, 1
      %s44 = scalar_select %p41, %s42, %s43
      %p47 = pneg %p41
      %p48 = scmp.eq.s32.totalorder %s13, 1
      %p49 = por %p47, %p48
      %p50 = scmp.ne.s32.totalorder %s42, %s45
      %p51 = scmp.eq.s32.totalorder %s13, 0
      %p52 = por %p50, %p51
      %p53 = scmp.ne.s32.totalorder %s42, %s45
      %p54 = scmp.eq.s32.totalorder %s18, 1
      %p55 = por %p53, %p54
      %p56 = scmp.ne.s32.totalorder %s45, %s46
      %p57 = scmp.eq.s32.totalorder %s18, 0
      %p58 = por %p56, %p57
      %p59 = scmp.ne.s32.totalorder %s45, %s46
      %p60 = scmp.eq.s32.totalorder %s19, 1
      %p61 = por %p59, %p60
      %p63 = scmp.ne.s32.totalorder %s46, %s62
      %p64 = scmp.eq.s32.totalorder %s19, 0
      %p65 = por %p63, %p64
      %s66 = ssub.s32 %s22, %s31
      %p67 = scmp.eq.s32.totalorder %s66, 0
      %s69 = sadd.s32 %s68, 1
      %s70 = scalar_select %p67, %s68, %s69
      %p73 = pneg %p67
      %p74 = scmp.eq.s32.totalorder %s13, 1
      %p75 = por %p73, %p74
      %p76 = scmp.ne.s32.totalorder %s68, %s71
      %p77 = scmp.eq.s32.totalorder %s13, 0
      %p78 = por %p76, %p77
      %p79 = scmp.ne.s32.totalorder %s68, %s71
      %p80 = scmp.eq.s32.totalorder %s18, 1
      %p81 = por %p79, %p80
      %p82 = scmp.ne.s32.totalorder %s71, %s72
      %p83 = scmp.eq.s32.totalorder %s18, 0
      %p84 = por %p82, %p83
      %p85 = scmp.ne.s32.totalorder %s71, %s72
      %p86 = scmp.eq.s32.totalorder %s19, 1
      %p87 = por %p85, %p86
      %p89 = scmp.ne.s32.totalorder %s72, %s88
      %p90 = scmp.eq.s32.totalorder %s19, 0
      %p91 = por %p89, %p90
      %s92 = smul.u32 %s22, %s21
      %s93 = smul.u32 %s31, %s35
      %s94 = ssub.s32 %s20, %s39
      %s95 = ssub.s32 %s92, %s93
      %s96 = sor.u32 %s94, %s95
      %p97 = scmp.eq.s32.totalorder %s96, 0
      %s99 = sadd.s32 %s98, 1
      %s100 = scalar_select %p97, %s98, %s99
      %p103 = pneg %p97
      %p104 = scmp.eq.s32.totalorder %s13, 1
      %p105 = por %p103, %p104
      %p106 = scmp.ne.s32.totalorder %s98, %s101
      %p107 = scmp.eq.s32.totalorder %s13, 0
      %p108 = por %p106, %p107
      %p109 = scmp.ne.s32.totalorder %s98, %s101
      %p110 = scmp.eq.s32.totalorder %s18, 1
      %p111 = por %p109, %p110
      %p112 = scmp.ne.s32.totalorder %s101, %s102
      %p113 = scmp.eq.s32.totalorder %s18, 0
      %p114 = por %p112, %p113
      %p115 = scmp.ne.s32.totalorder %s101, %s102
      %p116 = scmp.eq.s32.totalorder %s19, 1
      %p117 = por %p115, %p116
      %p119 = scmp.ne.s32.totalorder %s102, %s118
      %p120 = scmp.eq.s32.totalorder %s19, 0
      %p121 = por %p119, %p120
      %p122 = scmp.le.s32.totalorder 1, %s13
      %p123 = scmp.lt.s32.totalorder %s13, 3
      %p124 = pnand %p122, %p123
      %p125 = pneg %p124
      // Predicated region
      $region9: #{tpu_custom_call.1} parent=5 // pred_check
        _
      $region10: #{tpu_custom_call.1} parent=5 // pred_check_branch
        %127 = sbr.rel (%p124) target = $region12
      $region11: #{tpu_custom_call.1} parent=5 // pred_region
        %s128 = ssub.s32 %s13, 1
        // Predicated region
        $region13: #{tpu_custom_call.1} parent=11 // pred_check
          %p129 = pneg %p58
        $region14: #{tpu_custom_call.1} parent=11 // pred_check_branch
          %131 = sbr.rel (%p129) target = $region16
        $region15: #{tpu_custom_call.1} parent=11 // pred_region
          %s133 = ssub.s32 128, 128
          %134 = vsyncadd [#allocation5], %s133
          %s135 = smul.addr %s23, 128
          %s136 = scalar_lea.hbm %s0, %s135
          %s138 = sshll.u32 [#allocation4], 4
          %s139 = int_to_ptr.vmem [resolvable:$true] %s138
          %141 = dma.hbm_to_vmem [thread:$0]  %s136, 128, %s139, [#allocation5]
        $region16: #{tpu_custom_call.1} parent=11 // pred_fallthru
          _
        // Predicated region
        $region17: #{tpu_custom_call.1} parent=11 // pred_check
          %p142 = pneg %p84
        $region18: #{tpu_custom_call.1} parent=11 // pred_check_branch
          %144 = sbr.rel (%p142) target = $region20
        $region19: #{tpu_custom_call.1} parent=11 // pred_region
          %s146 = ssub.s32 1024, 1024
          %147 = vsyncadd [#allocation8], %s146
          %s148 = smul.addr %s25, 64
          %s149 = scalar_lea.hbm %s1, %s148
          %s150 = sshll.u32 [#allocation7], 4
          %s151 = int_to_ptr.vmem [resolvable:$true] %s150
          %156 = dma.hbm_to_vmem [thread:$0]  %s149, 1024, %s151, [#allocation8], 64, 64, 4
        $region20: #{tpu_custom_call.1} parent=11 // pred_fallthru
          _
      $region12: #{tpu_custom_call.1} parent=5 // pred_fallthru
        _
      %p157 = scmp.lt.s32.totalorder %s13, 2
      // Predicated region
      $region21: #{tpu_custom_call.1} parent=5 // pred_check
        %p158 = pneg %p157
      $region22: #{tpu_custom_call.1} parent=5 // pred_check_branch
        %160 = sbr.rel (%p158) target = $region24
      $region23: #{tpu_custom_call.1} parent=5 // pred_region
        _
      $region24: #{tpu_custom_call.1} parent=5 // pred_fallthru
        _
      %p161 = scmp.le.s32.totalorder 1, %s13
      %p162 = scmp.lt.s32.totalorder %s13, 3
      %p163 = pnand %p161, %p162
      %p164 = pneg %p163
      // Predicated region
      $region25: #{tpu_custom_call.1} parent=5 // pred_check
        _
      $region26: #{tpu_custom_call.1} parent=5 // pred_check_branch
        %166 = sbr.rel (%p163) target = $region28
      $region27: #{tpu_custom_call.1} parent=5 // pred_region
        %s167 = ssub.s32 %s13, 1
        // Predicated region
        $region29: #{tpu_custom_call.1} parent=27 // pred_check
          %p168 = pneg %p58
        $region30: #{tpu_custom_call.1} parent=27 // pred_check_branch
          %170 = sbr.rel (%p168) target = $region32
        $region31: #{tpu_custom_call.1} parent=27 // pred_region
          %171 = dma.done [#allocation5], 128
        $region32: #{tpu_custom_call.1} parent=27 // pred_fallthru
          _
        // Predicated region
        $region33: #{tpu_custom_call.1} parent=27 // pred_check
          %p172 = pneg %p84
        $region34: #{tpu_custom_call.1} parent=27 // pred_check_branch
          %174 = sbr.rel (%p172) target = $region36
        $region35: #{tpu_custom_call.1} parent=27 // pred_region
          %175 = dma.done [#allocation8], 1024
        $region36: #{tpu_custom_call.1} parent=27 // pred_fallthru
          _
        %p176 = pneg %p58
        %p177 = pneg %p55
        %p178 = pneg %p84
        %p179 = pneg %p81
        %p180 = pneg %p114
        %p181 = pneg %p111
        %s182 = sand.u32 %s101, 1
        %s183 = scalar_lea.sflag [#allocation6], %s182
        %s184 = sand.u32 %s101, 1
        %s185 = smul.addr %s184, 8
        %s186 = scalar_lea.vmem [#allocation9], %s185
        %s187 = smul.u32 %s25, %s24
        %p189 = scmp.eq.s32.totalorder %s24, 0
        %p190 = scmp.eq.s32.totalorder %s25, 0
        %p191 = pnand %p189, %p190
        %p192 = pneg %p191
        // Predicated region
        $region37: #{tpu_custom_call.1} parent=27 // pred_check
          _
        $region38: #{tpu_custom_call.1} parent=27 // pred_check_branch
          %194 = sbr.rel (%p191) target = $region40
        $region39: #{tpu_custom_call.1} parent=27 // pred_region
          %v195 = vld [vmem:[#allocation4] sm:$0xff]
          %v196 = vmul.f32 %v195, %v195
          %197 = vadd.xlane.f32.xlu0 %v196
          %v198 = vpop.xlane.xlu0 %197
          %v199 = vmax.f32 %v198, 1e-24
          %v200 = vrsqrt.pop %v199
          %v201 = vmul.f32 %v195, %v200
          %v202 = vpack.c.bf16 %v201, %v201
          %203 = vst [vmem:[#allocation2] sm:$0xf] %v202
          %vm204 = vcmask 7168
          %205 = vst.msk [vmem:[#allocation3] sm:$0xff] %vm204, -112.0
        $region40: #{tpu_custom_call.1} parent=27 // pred_fallthru
          _
        %v206 = vld [vmem:[#allocation2] sm:$0xf]
        %v207 = vld [vmem:[#allocation7] sm:$0xf]
        %v208 = vld [vmem:[#allocation7 + $0x4] sm:$0xf]
        %v209 = vld [vmem:[#allocation7 + $0x8] sm:$0xf]
        %v210 = vld [vmem:[#allocation7 + $0xc] sm:$0xf]
        %v211 = vld [vmem:[#allocation7 + $0x10] sm:$0xf]
        %v212 = vld [vmem:[#allocation7 + $0x14] sm:$0xf]
        %v213 = vld [vmem:[#allocation7 + $0x18] sm:$0xf]
        %v214 = vld [vmem:[#allocation7 + $0x1c] sm:$0xf]
        %v215 = vld [vmem:[#allocation7 + $0x20] sm:$0xf]
        %v216 = vld [vmem:[#allocation7 + $0x24] sm:$0xf]
        %v217 = vld [vmem:[#allocation7 + $0x28] sm:$0xf]
        %v218 = vld [vmem:[#allocation7 + $0x2c] sm:$0xf]
        %v219 = vld [vmem:[#allocation7 + $0x30] sm:$0xf]
        %v220 = vld [vmem:[#allocation7 + $0x34] sm:$0xf]
        %v221 = vld [vmem:[#allocation7 + $0x38] sm:$0xf]
        %v222 = vld [vmem:[#allocation7 + $0x3c] sm:$0xf]
        %v239 = vunpack.c.l.b16 %v207
        %v240 = vunpack.c.l.b16 %v208
        %v241 = vunpack.c.l.b16 %v209
        %v242 = vunpack.c.l.b16 %v210
        %v243 = vunpack.c.l.b16 %v211
        %v244 = vunpack.c.l.b16 %v212
        %v245 = vunpack.c.l.b16 %v213
        %v246 = vunpack.c.l.b16 %v214
        %v247 = vunpack.c.l.b16 %v215
        %v248 = vunpack.c.l.b16 %v216
        %v249 = vunpack.c.l.b16 %v217
        %v250 = vunpack.c.l.b16 %v218
        %v251 = vunpack.c.l.b16 %v219
        %v252 = vunpack.c.l.b16 %v220
        %v253 = vunpack.c.l.b16 %v221
        %v254 = vunpack.c.l.b16 %v222
        %v255 = vpack.c.b16 %v240, %v239
        %v256 = vpack.c.b16 %v242, %v241
        %v257 = vpack.c.b16 %v244, %v243
        %v258 = vpack.c.b16 %v246, %v245
        %v259 = vpack.c.b16 %v248, %v247
        %v260 = vpack.c.b16 %v250, %v249
        %v261 = vpack.c.b16 %v252, %v251
        %v262 = vpack.c.b16 %v254, %v253
        %271 = vmatprep.subr.bf16.mxu0 0
        %272 = vmatpush1.bf16.msra.mxu0 %v255
        %273 = vmatprep.subr.bf16.mxu0 0
        %274 = vmatpush1.bf16.msra.mxu0 %v256
        %275 = vmatprep.subr.bf16.mxu0 0
        %276 = vmatpush1.bf16.msra.mxu0 %v257
        %277 = vmatprep.subr.bf16.mxu0 0
        %278 = vmatpush1.bf16.msra.mxu0 %v258
        %279 = vmatprep.subr.bf16.mxu0 0
        %280 = vmatpush1.bf16.msra.mxu0 %v259
        %281 = vmatprep.subr.bf16.mxu0 0
        %282 = vmatpush1.bf16.msra.mxu0 %v260
        %283 = vmatprep.subr.bf16.mxu0 0
        %284 = vmatpush1.bf16.msra.mxu0 %v261
        %285 = vmatprep.subr.bf16.mxu0 0
        %286 = vmatpush1.bf16.msra.mxu0 %v262
        %287 = vmatprep.subr.bf16.mxu0 0
        %288 = vmatpush1.bf16.msra.mxu0 0
        %289 = vmatprep.subr.bf16.mxu0 0
        %290 = vmatpush1.bf16.msra.mxu0 0
        %291 = vmatprep.subr.bf16.mxu0 0
        %292 = vmatpush1.bf16.msra.mxu0 0
        %293 = vmatprep.subr.bf16.mxu0 0
        %294 = vmatpush1.bf16.msra.mxu0 0
        %295 = vmatprep.subr.bf16.mxu0 0
        %296 = vmatpush1.bf16.msra.mxu0 0
        %297 = vmatprep.subr.bf16.mxu0 0
        %298 = vmatpush1.bf16.msra.mxu0 0
        %299 = vmatprep.subr.bf16.mxu0 0
        %300 = vmatpush1.bf16.msra.mxu0 0
        %301 = vmatprep.subr.bf16.mxu0 0
        %302 = vmatpush1.bf16.msra.mxu0 0
        %303 = vmatprep.mubr.bf16.mxu0 0
        %304 = vmatmul.mubr.bf16.gmra.mrb[0].mxu0 %v206
        %v305 = vpop.f32.mrb[0].mxu0
        %v306 = vadd.f32 0.0, %v305
        %v307 = vpop.f32.mrb[0].mxu0
        %v308 = vpop.f32.mrb[0].mxu0
        %v309 = vpop.f32.mrb[0].mxu0
        %310 = vdwg.mxu0
        // Predicated region
        $region41: #{tpu_custom_call.1} parent=27 // pred_check
          %p311 = pneg %p189
        $region42: #{tpu_custom_call.1} parent=27 // pred_check_branch
          %313 = sbr.rel (%p311) target = $region44
        $region43: #{tpu_custom_call.1} parent=27 // pred_region
          %v314 = vld [vmem:[#allocation3] sm:$0xff]
          %v315 = vmul.f32 %v306, 1.442695
          %v316 = vpow.pop %v315
          %317 = vadd.xlane.f32.xlu0 %v316
          %v318 = vpop.xlane.xlu0 %317
          %v319 = vadd.f32 %v314, %v318
          %vm320 = vcmask 7168
          %321 = vst.msk [vmem:[#allocation3] sm:$0xff] %vm320, %v319
        $region44: #{tpu_custom_call.1} parent=27 // pred_fallthru
          _
        %p322 = scmp.eq.s32.totalorder %s24, 1
        // Predicated region
        $region45: #{tpu_custom_call.1} parent=27 // pred_check
          %p323 = pneg %p322
        $region46: #{tpu_custom_call.1} parent=27 // pred_check_branch
          %325 = sbr.rel (%p323) target = $region48
        $region47: #{tpu_custom_call.1} parent=27 // pred_region
          %v326 = vmul.f32 %v306, 0.033333335
          %v327 = vmul.f32 %v326, %v326
          %v328 = vsub.f32 1.0, %v327
          %v329 = vmax.f32 %v328, 0.0
          %v330 = vrsqrt.pop %v329
          %v331 = vmul.f32 %v329, %v330
          %vm332 = vcmp.eq.f32.partialorder %v329, inf
          %v333 = vsel %vm332, %v329, %v331
          %vm334 = vcmp.eq.f32.partialorder %v329, 0.0
          %v335 = vand.u32 %v329, 2147483648
          %v336 = vsel %vm334, %v335, %v333
          %v337 = vmul.f32 %v306, 0.87758255
          %v338 = vmul.f32 %v336, 14.382766
          %v339 = vsub.f32 %v337, %v338
          %v340 = vmul.f32 %v306, 1.442695
          %v341 = vpow.pop %v340
          %v342 = vmul.f32 %v339, 1.442695
          %v343 = vpow.pop %v342
          %v344 = vld [vmem:[#allocation3] sm:$0xff]
          %346 = vset.pattern.permute.xlu0 0
          %347 = vperm.xlu0 %346, %v344
          %v348 = vpop.permute.xlu0 %347
          %v350 = vsub.f32 %v348, %v341
          %v351 = vadd.f32 %v343, %v350
          %v352 = vrcp.pop %v351
          %v353 = vmul.f32 %v343, %v352
          %354 = vst [vmem:[%s186] sm:$0xff] %v353
        $region48: #{tpu_custom_call.1} parent=27 // pred_fallthru
          _
        %s355 = sand.u32 %s101, 1
        %s356 = scalar_lea.sflag [#allocation6], %s355
        %s357 = sand.u32 %s101, 1
        %s358 = smul.addr %s357, 8
        %s359 = scalar_lea.vmem [#allocation9], %s358
        // Predicated region
        $region49: #{tpu_custom_call.1} parent=27 // pred_check
          %p360 = pneg %p111
        $region50: #{tpu_custom_call.1} parent=27 // pred_check_branch
          %362 = sbr.rel (%p360) target = $region52
        $region51: #{tpu_custom_call.1} parent=27 // pred_region
          %s363 = smul.u32 %s25, %s24
          %s365 = ssub.s32 128, 128
          %366 = vsyncadd %s356, %s365
          %s367 = sadd.s32 %s363, %s23
          %s368 = smul.addr %s367, 128
          %s369 = scalar_lea.hbm %s2, %s368
          %s371 = sshll.u32 %s359, 4
          %s372 = int_to_ptr.vmem [resolvable:$true] %s371
          %374 = dma.vmem_to_hbm [thread:$0]  %s372, 128, %s369, %s356
        $region52: #{tpu_custom_call.1} parent=27 // pred_fallthru
          _
      $region28: #{tpu_custom_call.1} parent=5 // pred_fallthru
        _
      %p375 = scmp.le.s32.totalorder 2, %s13
      // Predicated region
      $region53: #{tpu_custom_call.1} parent=5 // pred_check
        %p376 = pneg %p375
      $region54: #{tpu_custom_call.1} parent=5 // pred_check_branch
        %378 = sbr.rel (%p376) target = $region56
      $region55: #{tpu_custom_call.1} parent=5 // pred_region
        %s379 = ssub.s32 %s13, 2
        // Predicated region
        $region57: #{tpu_custom_call.1} parent=55 // pred_check
          %p380 = pneg %p117
        $region58: #{tpu_custom_call.1} parent=55 // pred_check_branch
          %382 = sbr.rel (%p380) target = $region60
        $region59: #{tpu_custom_call.1} parent=55 // pred_region
          %s383 = sand.u32 %s102, 1
          %s384 = scalar_lea.sflag [#allocation6], %s383
          %s385 = sand.u32 %s102, 1
          %s386 = smul.addr %s385, 8
          %s387 = scalar_lea.vmem [#allocation9], %s386
          %388 = dma.done %s384, 128
        $region60: #{tpu_custom_call.1} parent=55 // pred_fallthru
          _
      $region56: #{tpu_custom_call.1} parent=5 // pred_fallthru
        _
    $region6: #{tpu_custom_call.1} parent=1 // loop_footer
      %s17 = sadd.s32 1, %s13
    $region7: #{tpu_custom_call.1} parent=1 // loop_footer_branch
      %12 = sbr.rel target = $region3
    $region8: #{tpu_custom_call.1} parent=1 // loop_exit
      _
    %389 = vsyncpa [#allocation5], 1
    %s390 = scalar_lea.sflag [#allocation5], 1
    %391 = vsyncpa %s390, 1
    %392 = vsyncpa [#allocation8], 1
    %393 = vsyncpa [#allocation6], 1
    %s394 = scalar_lea.sflag [#allocation6], 1
    %395 = vsyncpa %s394, 1

</llo_original>
